<compile_context>
chip_gen: v5e
topology: v5e:2x2
jax: 0.10.0
libtpu: 0.0.40
codegen_flags: <defaults>
</compile_context>

<pallas_src>
import math
from functools import partial

import jax
import jax.numpy as jnp
from jax.experimental import pallas as pl
from jax.experimental.pallas import tpu as pltpu

NEG_SLOPE = 0.2
LANE = 128
SUBLANE = 8
PARTIAL_TILE_ALIGN = 16          # bf16 sublane packing: partial row tiles must be 16-aligned
MASK_DTYPE = jnp.bfloat16        # additive mask values {0, -1e30} are fine in bf16
MASK_BIG = 1e30


def _round_up(x, m):
    return ((x + m - 1) // m) * m


# --------------------------------------------------------------------------- #
# Generation-aware defaults (row tile + scoped VMEM limit).
# --------------------------------------------------------------------------- #
def _chip_defaults():
    try:
        vmem_bytes = int(pltpu.get_tpu_info().vmem_capacity_bytes)
    except Exception:
        # Unknown chip: fall back to the conservative, previously-validated config.
        return 256, 32 * 1024 * 1024
    if vmem_bytes <= 64 * 1024 * 1024:      # v7x-class: 64 MiB VMEM per TensorCore
        return 256, 48 * 1024 * 1024
    return 512, 96 * 1024 * 1024            # v5e / v6e: 128 MiB VMEM


def _pick_row_tile(n, row_tile):
    if n >= 2 * row_tile:
        return row_tile
    if n >= 2 * PARTIAL_TILE_ALIGN:
        # Keep at least two destination-row tiles so the second TensorCore gets work.
        return _round_up((n + 1) // 2, PARTIAL_TILE_ALIGN)
    return _round_up(max(n, 1), SUBLANE)    # tiny graph: single full-array tile


# --------------------------------------------------------------------------- #
# Optional single-buffering of grid-invariant inputs (probed once).
# --------------------------------------------------------------------------- #
_BUFFERED_OK = None


def _single_buffer_ok():
    global _BUFFERED_OK
    if _BUFFERED_OK is None:
        try:
            def _probe(x_ref, o_ref):
                o_ref[...] = x_ref[...] + 1.0

            fn = pl.pallas_call(
                _probe,
                grid=(2,),
                in_specs=[pl.BlockSpec((8, LANE), lambda i: (0, 0),
                                       pipeline_mode=pl.Buffered(1))],
                out_specs=pl.BlockSpec((8, LANE), lambda i: (0, 0)),
                out_shape=jax.ShapeDtypeStruct((8, LANE), jnp.float32),
            )
            jax.block_until_ready(fn(jnp.zeros((8, LANE), jnp.float32)))
            _BUFFERED_OK = True
        except Exception:
            _BUFFERED_OK = False
    return _BUFFERED_OK


def _resident_spec(block_shape, index_map):
    """BlockSpec for a grid-invariant input: single-buffered when supported."""
    if _single_buffer_ok():
        return pl.BlockSpec(block_shape, index_map, pipeline_mode=pl.Buffered(1))
    return pl.BlockSpec(block_shape, index_map)


# --------------------------------------------------------------------------- #
# Kernel 1: fused node projection.
#   hw = h @ Wc with Wc = [ W1^T | v ] (128-lane padded)
#     columns [0 : Dout_p)   -> h_trans (stored in agg dtype, bf16 by default)
#     column   Dout_p + 0    -> s_src = (W2 h) . attn[:D]  (folded: h @ (W2^T attn1))
#     column   Dout_p + 1    -> s_dst = (W2 h) . attn[D:]
# --------------------------------------------------------------------------- #
def proj_kernel(h_ref, wc_ref, ht_ref, s_ref, *, dout_p):
    hw = jnp.dot(h_ref[...], wc_ref[...], preferred_element_type=jnp.float32)
    ht_ref[...] = hw[:, :dout_p].astype(ht_ref.dtype)   # lane-tile aligned split
    s_ref[...] = hw[:, dout_p:]                          # (TM, 128) col0=s_src col1=s_dst


# --------------------------------------------------------------------------- #
# Kernel 2: masked edge-softmax + aggregation for one destination-row tile.
#   mask_ref holds the precomputed ADDITIVE mask: 0 for edges, -1e30 for non-edges.
# --------------------------------------------------------------------------- #
def attn_agg_kernel(mask_ref, ht_ref, s_src_ref, s_tile_ref, b_ref, out_ref, *, agg_dtype):
    s_src = s_src_ref[...]                              # (1, Np) tile-invariant row
    s_dst = s_tile_ref[:, 1:2]                          # (TM, 1)

    z = s_dst + s_src                                   # (TM, Np)
    e = jnp.maximum(z, NEG_SLOPE * z)                   # LeakyReLU in 2 VPU ops
    e_m = e + mask_ref[...].astype(jnp.float32)         # additive {0, -1e30} mask
    row_max = jnp.max(e_m, axis=1, keepdims=True)
    p = jnp.exp(e_m - row_max)                          # non-edges underflow to exact 0
    denom = jnp.sum(p, axis=1, keepdims=True)           # >= 1 whenever the row has an edge

    # Aggregate first (MXU, bf16 operands by default), normalize after: O(TM*Dout)
    # multiplies instead of an O(TM*N) divide on the attention matrix.
    h_agg = jnp.dot(p.astype(agg_dtype), ht_ref[...], preferred_element_type=jnp.float32)

    # (TM,1) zero-in-degree guard: rows with no edges (incl. padded rows) have
    # row_max ~ -1e30 and must aggregate to exactly 0 (DGL sum of no messages).
    valid = (row_max > jnp.float32(-1e25)).astype(jnp.float32)
    scale = pl.reciprocal(denom, approx=False) * valid
    h_new = h_agg * scale + b_ref[...]
    out_ref[...] = jnp.maximum(h_new, NEG_SLOPE * h_new)


# --------------------------------------------------------------------------- #
# One GAT layer = two row-tiled pallas_calls.
# --------------------------------------------------------------------------- #
def _layer_pallas(h_p, mask_p, wc, bias_p, *, tm, agg_dtype, vmem_limit):
    n_p, din_p = h_p.shape
    dc = wc.shape[1]
    dout_p = dc - LANE
    grid = (n_p // tm,)

    cparams = pltpu.CompilerParams(
        dimension_semantics=("parallel",),
        vmem_limit_bytes=vmem_limit,
    )
    agg_bytes = jnp.dtype(agg_dtype).itemsize

    proj_cost = pl.CostEstimate(
        flops=2 * n_p * din_p * dc,
        transcendentals=0,
        bytes_accessed=4 * (n_p * din_p + din_p * dc)
        + n_p * (dout_p * agg_bytes + LANE * 4),
    )
    ht, s = pl.pallas_call(
        partial(proj_kernel, dout_p=dout_p),
        grid=grid,
        in_specs=[
            pl.BlockSpec((tm, din_p), lambda i: (i, 0)),      # node-feature rows
            _resident_spec((din_p, dc), lambda i: (0, 0)),    # packed weights, grid-invariant
        ],
        out_specs=(
            pl.BlockSpec((tm, dout_p), lambda i: (i, 0)),     # h_trans (agg dtype)
            pl.BlockSpec((tm, LANE), lambda i: (i, 0)),       # scores (lane-dense)
        ),
        out_shape=(
            jax.ShapeDtypeStruct((n_p, dout_p), agg_dtype),
            jax.ShapeDtypeStruct((n_p, LANE), jnp.float32),
        ),
        compiler_params=cparams,
        cost_estimate=proj_cost,
    )(h_p, wc)

    # Source-score row is tile-invariant: one tiny XLA transpose per layer, not per tile.
    s_src_row = jnp.transpose(s[:, 0:1])                      # (1, N_p)

    attn_cost = pl.CostEstimate(
        flops=2 * n_p * n_p * dout_p + 7 * n_p * n_p,
        transcendentals=n_p * n_p,
        bytes_accessed=n_p * n_p * mask_p.dtype.itemsize
        + n_p * dout_p * (agg_bytes + 4) + n_p * (LANE + 1) * 4,
    )
    out = pl.pallas_call(
        partial(attn_agg_kernel, agg_dtype=agg_dtype),
        grid=grid,
        in_specs=[
            # Streamed O(N^2) additive mask rows (bf16 halves the HBM stream).
            # TODO(synk): pl.Buffered(3) here if profiling shows exposed adjacency DMA.
            pl.BlockSpec((tm, n_p), lambda i: (i, 0)),
            _resident_spec((n_p, dout_p), lambda i: (0, 0)),  # h_trans, resident/single-buffered
            _resident_spec((1, n_p), lambda i: (0, 0)),       # s_src row, resident
            pl.BlockSpec((tm, LANE), lambda i: (i, 0)),       # scores for this dst tile
            _resident_spec((1, dout_p), lambda i: (0, 0)),    # bias, resident
        ],
        out_specs=pl.BlockSpec((tm, dout_p), lambda i: (i, 0)),
        out_shape=jax.ShapeDtypeStruct((n_p, dout_p), jnp.float32),
        compiler_params=cparams,
        cost_estimate=attn_cost,
    )(mask_p, ht, s_src_row, s, bias_p)
    return out


def _pack_layer(p, din_p, dout_p):
    """Build the combined, 128-padded weight matrix and bias for one layer."""
    w1 = jnp.asarray(p["W1"], jnp.float32)      # (Dout, Din)
    w2 = jnp.asarray(p["W2"], jnp.float32)      # (Dout, Din)
    a1 = jnp.asarray(p["attn1"], jnp.float32)   # (Dout,)
    a2 = jnp.asarray(p["attn2"], jnp.float32)   # (Dout,)
    b = jnp.asarray(p["bias"], jnp.float32)     # (Dout,)
    dout, din = w1.shape
    # Fold the attention projection: s_src = h @ (W2^T a1), s_dst = h @ (W2^T a2)
    v1 = w2.T @ a1
    v2 = w2.T @ a2
    wc = jnp.zeros((din_p, dout_p + LANE), jnp.float32)
    wc = wc.at[:din, :dout].set(w1.T)
    wc = wc.at[:din, dout_p].set(v1)
    wc = wc.at[:din, dout_p + 1].set(v2)
    bias_p = jnp.zeros((1, dout_p), jnp.float32).at[0, :dout].set(b)
    return wc, bias_p


def protein_atom_channel(h, adj, params, *, row_tile=None, vmem_limit=None,
                         agg_dtype=jnp.bfloat16):
    """Stacked GAT layers (IntraChannel / ProteinAtomChannel forward).

    h:   (N, in_dim) float node features
    adj: (N, N) dense adjacency, adj[dst, src] in {0, 1}
    agg_dtype: dtype of the p @ h_trans aggregation operands (bf16 = full MXU rate;
               pass jnp.float32 for tight-accuracy validation).
    """
    n, in_dim = h.shape
    out_dim = params[-1]["W1"].shape[0]

    d_tile, d_vmem = _chip_defaults()
    row_tile = d_tile if row_tile is None else row_tile
    vmem_limit = d_vmem if vmem_limit is None else vmem_limit

    tm = _pick_row_tile(n, row_tile)
    n_p = _round_up(n, tm)
    din_p = _round_up(in_dim, LANE)

    # Pad once. Padded source columns are masked out (-1e30) so padded nodes never
    # contribute messages to real nodes; padded feature lanes stay exactly zero.
    h_p = jnp.zeros((n_p, din_p), jnp.float32).at[:n, :in_dim].set(h.astype(jnp.float32))
    adj_f = jnp.zeros((n_p, n_p), jnp.float32).at[:n, :n].set(adj.astype(jnp.float32))
    # Additive mask precomputed once: 0 for edges, -1e30 for non-edges (incl. padding).
    mask_p = ((adj_f - 1.0) * jnp.float32(MASK_BIG)).astype(MASK_DTYPE)

    for p in params:
        dout = p["W1"].shape[0]
        dout_p = _round_up(dout, LANE)
        wc, bias_p = _pack_layer(p, h_p.shape[1], dout_p)
        h_p = _layer_pallas(h_p, mask_p, wc, bias_p, tm=tm,
                            agg_dtype=agg_dtype, vmem_limit=vmem_limit)

    return h_p[:n, :out_dim]


# --------------------------------------------------------------------------- #
# Deterministic parameter init (mirrors reset_parameters shapes)
# --------------------------------------------------------------------------- #
def _xavier_normal(key, shape):
    fan_out, fan_in = shape
    std = math.sqrt(2.0 / (fan_in + fan_out))
    return std * jax.random.normal(key, shape, jnp.float32)


def init_params(key, num_layers, in_dim, hidden_dim):
    params = []
    dims = [in_dim] + [hidden_dim] * num_layers
    for layer in range(num_layers):
        din, dout = dims[layer], dims[layer + 1]
        k1, k2, k3, ka, key = jax.random.split(key, 5)
        attn = _xavier_normal(ka, (1, 2 * dout))[0]
        params.append({
            "W1": _xavier_normal(k1, (dout, din)),
            "W2": _xavier_normal(k2, (dout, din)),
            "W3": _xavier_normal(k3, (dout, din)),   # unused in forward (parity with ref)
            "attn1": attn[:dout],
            "attn2": attn[dout:],
            "bias": jnp.zeros((dout,), jnp.float32),
        })
    return params


# --------------------------------------------------------------------------- #
# Pure-JAX reference (original math) for a correctness check
# --------------------------------------------------------------------------- #
def _lrelu_ref(x, slope=NEG_SLOPE):
    return jnp.where(x >= 0, x, slope * x)


def gat_layer_ref(h, adj, p):
    h_trans = h @ p["W1"].T
    h_att = h @ p["W2"].T
    s_src = h_att @ p["attn1"]
    s_dst = h_att @ p["attn2"]
    e = _lrelu_ref(s_dst[:, None] + s_src[None, :])
    mask = adj > 0
    e_m = jnp.where(mask, e, -1e30)
    p_exp = jnp.where(mask, jnp.exp(e_m - jnp.max(e_m, axis=1, keepdims=True)), 0.0)
    denom = jnp.sum(p_exp, axis=1, keepdims=True)
    a = jnp.where(denom > 0, p_exp / jnp.maximum(denom, 1e-30), 0.0)
    return _lrelu_ref(a @ h_trans + p["bias"][None, :])


def protein_atom_channel_ref(h, adj, params):
    for p in params:
        h = gat_layer_ref(h, adj, p)
    return h


# --------------------------------------------------------------------------- #
if __name__ == "__main__":
    NUM_LAYERS = 2
    N_NODES = 40          # exercises padding (N_p=64), a 2-step parallel grid (tm=32)
    IN_DIM = 16
    HIDDEN_DIM = 32

    key = jax.random.PRNGKey(0)
    k_h, k_adj, k_params = jax.random.split(key, 3)

    h = jax.random.normal(k_h, (N_NODES, IN_DIM), jnp.float32)
    # deterministic random graph with self-loops; adj[dst, src]
    adj = jax.random.bernoulli(k_adj, 0.3, (N_NODES, N_NODES)).astype(jnp.float32)
    adj = jnp.maximum(adj, jnp.eye(N_NODES, dtype=jnp.float32))
    adj = adj.at[5, :].set(0.0)   # one zero-in-degree node -> exercises the guard path

    params = init_params(k_params, NUM_LAYERS, IN_DIM, HIDDEN_DIM)
    ref = protein_atom_channel_ref(h, adj, params)

    # Default path: bf16 p @ h_trans aggregation (full MXU rate, ~1e-2 rel accuracy).
    out = jax.block_until_ready(protein_atom_channel(h, adj, params))
    assert out.shape == (N_NODES, HIDDEN_DIM)
    assert jnp.allclose(out, ref, atol=5e-2, rtol=5e-2), "bf16-agg mismatch vs reference"

    # f32 aggregation path for tight-accuracy validation.
    out_f32 = jax.block_until_ready(
        protein_atom_channel(h, adj, params, agg_dtype=jnp.float32))
    assert jnp.allclose(out_f32, ref, atol=2e-4, rtol=2e-4), "f32-agg mismatch vs reference"

    print("KERNEL_OK")
</pallas_src>

<mosaic_0001>
module attributes {stable_mosaic.version = 11 : i64} {
  func.func @_probe(%arg0: i32, %arg1: memref<8x128xf32, #tpu.memory_space<vmem>>, %arg2: memref<8x128xf32, #tpu.memory_space<vmem>>) attributes {dimension_semantics = [#tpu.dimension_semantics<arbitrary>], iteration_bounds = array<i64: 2>, scalar_prefetch = 0 : i64, scratch_operands = 0 : i64, tpu.core_type = #tpu.core_type<tc>, window_params = [{pipeline_mode = #tpu.pipeline_mode<synchronous>, transform_indices = @transform_0, window_bounds = array<i64: 8, 128>}, {pipeline_mode = #tpu.pipeline_mode<synchronous>, transform_indices = @transform_1, window_bounds = array<i64: 8, 128>}]} {
    %c0 = arith.constant 0 : index
    %c0_0 = arith.constant 0 : index
    %0 = vector.load %arg1[%c0, %c0_0] : memref<8x128xf32, #tpu.memory_space<vmem>>, vector<8x128xf32>
    %cst = arith.constant 1.000000e+00 : f32
    %1 = vector.broadcast %cst : f32 to vector<8x128xf32>
    %2 = arith.addf %0, %1 : vector<8x128xf32>
    %c0_1 = arith.constant 0 : index
    %c0_2 = arith.constant 0 : index
    %3 = vector.load %arg2[%c0_1, %c0_2] : memref<8x128xf32, #tpu.memory_space<vmem>>, vector<8x128xf32>
    tpu.vector_store %arg2[%c0_1, %c0_2], %2 {strides = array<i32>} : memref<8x128xf32, #tpu.memory_space<vmem>>, vector<8x128xf32>,
    return
  }
  func.func @transform_0(%arg0: i32) -> (i32, i32) {
    %c0_i32 = arith.constant 0 : i32
    %c0_i32_0 = arith.constant 0 : i32
    %c0_i32_1 = arith.constant 0 : i32
    return %c0_i32, %c0_i32_0 : i32, i32
  }
  func.func @transform_1(%arg0: i32) -> (i32, i32) {
    %c0_i32 = arith.constant 0 : i32
    %c0_i32_0 = arith.constant 0 : i32
    %c0_i32_1 = arith.constant 0 : i32
    return %c0_i32, %c0_i32_0 : i32, i32
  }
}

module attributes {stable_mosaic.version = 11 : i64} {
  func.func @proj_kernel(%arg0: i32, %arg1: memref<32x128xf32, #tpu.memory_space<vmem>>, %arg2: memref<128x256xf32, #tpu.memory_space<vmem>>, %arg3: memref<32x128xbf16, #tpu.memory_space<vmem>>, %arg4: memref<32x128xf32, #tpu.memory_space<vmem>>) attributes {dimension_semantics = [#tpu.dimension_semantics<parallel>], iteration_bounds = array<i64: 2>, scalar_prefetch = 0 : i64, scratch_operands = 0 : i64, tpu.core_type = #tpu.core_type<tc>, window_params = [{transform_indices = @transform_0, window_bounds = array<i64: 32, 128>}, {pipeline_mode = #tpu.pipeline_mode<synchronous>, transform_indices = @transform_1, window_bounds = array<i64: 128, 256>}, {transform_indices = @transform_2, window_bounds = array<i64: 32, 128>}, {transform_indices = @transform_3, window_bounds = array<i64: 32, 128>}]} {
    %c0 = arith.constant 0 : index
    %c0_0 = arith.constant 0 : index
    %0 = vector.load %arg1[%c0, %c0_0] : memref<32x128xf32, #tpu.memory_space<vmem>>, vector<32x128xf32>
    %c0_1 = arith.constant 0 : index
    %c0_2 = arith.constant 0 : index
    %1 = vector.load %arg2[%c0_1, %c0_2] : memref<128x256xf32, #tpu.memory_space<vmem>>, vector<128x256xf32>
    %cst = arith.constant dense<0.000000e+00> : vector<32x256xf32>
    %2 = tpu.matmul %0, %1, %cst {dimension_numbers = #tpu.dot_dimension_numbers<[1], [0], [0], [1], [0, 0, 1, 1], [], []>} : vector<32x128xf32>, vector<128x256xf32>, vector<32x256xf32> -> vector<32x256xf32>
    %3 = vector.extract_strided_slice %2 {offsets = [0, 0], sizes = [32, 128], strides = [1, 1]} : vector<32x256xf32> to vector<32x128xf32>
    %4 = arith.truncf %3 : vector<32x128xf32> to vector<32x128xbf16>
    %c0_3 = arith.constant 0 : index
    %c0_4 = arith.constant 0 : index
    %5 = vector.load %arg3[%c0_3, %c0_4] : memref<32x128xbf16, #tpu.memory_space<vmem>>, vector<32x128xbf16>
    tpu.vector_store %arg3[%c0_3, %c0_4], %4 {strides = array<i32>} : memref<32x128xbf16, #tpu.memory_space<vmem>>, vector<32x128xbf16>,
    %6 = vector.extract_strided_slice %2 {offsets = [0, 128], sizes = [32, 128], strides = [1, 1]} : vector<32x256xf32> to vector<32x128xf32>
    %c0_5 = arith.constant 0 : index
    %c0_6 = arith.constant 0 : index
    %7 = vector.load %arg4[%c0_5, %c0_6] : memref<32x128xf32, #tpu.memory_space<vmem>>, vector<32x128xf32>
    tpu.vector_store %arg4[%c0_5, %c0_6], %6 {strides = array<i32>} : memref<32x128xf32, #tpu.memory_space<vmem>>, vector<32x128xf32>,
    return
  }
  func.func @transform_0(%arg0: i32) -> (i32, i32) {
    %c0_i32 = arith.constant 0 : i32
    %c0_i32_0 = arith.constant 0 : i32
    return %arg0, %c0_i32 : i32, i32
  }
  func.func @transform_1(%arg0: i32) -> (i32, i32) {
    %c0_i32 = arith.constant 0 : i32
    %c0_i32_0 = arith.constant 0 : i32
    %c0_i32_1 = arith.constant 0 : i32
    return %c0_i32, %c0_i32_0 : i32, i32
  }
  func.func @transform_2(%arg0: i32) -> (i32, i32) {
    %c0_i32 = arith.constant 0 : i32
    %c0_i32_0 = arith.constant 0 : i32
    return %arg0, %c0_i32 : i32, i32
  }
  func.func @transform_3(%arg0: i32) -> (i32, i32) {
    %c0_i32 = arith.constant 0 : i32
    %c0_i32_0 = arith.constant 0 : i32
    return %arg0, %c0_i32 : i32, i32
  }
}

</mosaic_0001>

<llo_original>
// kernel: tpu_custom_call.1
$region0: #{tpu_custom_call.1}
  #allocation0 [shape = 'u32[]', space=smem, size = 0x4, offset = 0x4, fixed_abs, tag = 'smem constant byte address 0x4 - core index']
  #allocation1 [shape = 'u32[72,128]{1,0:T(1,128)}', space=vmem, size = 0x9000, scoped, tag = 'internal scratch']
  %s0 = inlined_call_operand.hbm [shape: f32[8,128], index: 0, kind: input, shape index: {}]
  %s1 = inlined_call_operand.hbm [shape: f32[8,128], index: 1, kind: output, shape index: {}]
  %s2 = sld [smem:[#allocation0]]
  $region41: #{tpu_custom_call.1} parent=0
    _
  %s4 = ssub.s32 1, %s2
  %s5 = scalar_select 0, %s4, %s2
  $region1: #{tpu_custom_call.1} parent=0
    #allocation2 [shape = 'u8[4096]{0}', space=vmem, size = 0x1000, scoped, tag = 'input window, operand 0, single buffered']
    #allocation3 [shape = 's32[2]{0}', space=sflag, size = 0x8, scoped, tag = 'scoped memory for tpu_custom_call.1']
    #allocation4 [shape = 's32[2]{0}', space=sflag, size = 0x8, scoped, tag = 'scoped memory for tpu_custom_call.1']
    #allocation5 [shape = 'u8[4096]{0}', space=vmem, size = 0x1000, scoped, tag = 'output window, operand 0, single buffered']
    %6 = vsyncpa [#allocation3], 0
    %7 = vsyncpa [#allocation4], 0
    loop: start=0, step=1, limit=4
    $region2: #{tpu_custom_call.1} parent=1 // loop_pre_header
      _
    $region3: #{tpu_custom_call.1} parent=1 // loop_header
      %s9 = sphi 0, %s13
      %p10 = scmp.ge.s32.totalorder %s9, 4
      %s17 = sphi 0, %s17
      %s19 = sphi 0, %s17
      %s20 = sphi 0, %s19
      %s34 = sphi 0, %s20
      %s38 = sphi 0, %s38
      %s40 = sphi 0, %s38
      %s41 = sphi 0, %s40
      %s55 = sphi 0, %s41
    $region4: #{tpu_custom_call.1} parent=1 // loop_header_branch
      %12 = sbr.rel (%p10) target = $region8
    $region5: #{tpu_custom_call.1} parent=1 // loop_body
      %s14 = ssub.s32 %s9, 1
      %s15 = ssub.s32 %s9, 2
      %s16 = sadd.s32 %s9, 1
      %s18 = sadd.s32 %s17, 1
      %p21 = scmp.eq.s32.totalorder %s9, 1
      %p22 = scmp.ne.s32.totalorder %s17, %s19
      %p23 = scmp.eq.s32.totalorder %s9, 0
      %p24 = por %p22, %p23
      %p25 = scmp.ne.s32.totalorder %s17, %s19
      %p26 = scmp.eq.s32.totalorder %s14, 1
      %p27 = por %p25, %p26
      %p28 = scmp.ne.s32.totalorder %s19, %s20
      %p29 = scmp.eq.s32.totalorder %s14, 0
      %p30 = por %p28, %p29
      %p31 = scmp.ne.s32.totalorder %s19, %s20
      %p32 = scmp.eq.s32.totalorder %s15, 1
      %p33 = por %p31, %p32
      %p35 = scmp.ne.s32.totalorder %s20, %s34
      %p36 = scmp.eq.s32.totalorder %s15, 0
      %p37 = por %p35, %p36
      %s39 = sadd.s32 %s38, 1
      %p42 = scmp.eq.s32.totalorder %s9, 1
      %p43 = scmp.ne.s32.totalorder %s38, %s40
      %p44 = scmp.eq.s32.totalorder %s9, 0
      %p45 = por %p43, %p44
      %p46 = scmp.ne.s32.totalorder %s38, %s40
      %p47 = scmp.eq.s32.totalorder %s14, 1
      %p48 = por %p46, %p47
      %p49 = scmp.ne.s32.totalorder %s40, %s41
      %p50 = scmp.eq.s32.totalorder %s14, 0
      %p51 = por %p49, %p50
      %p52 = scmp.ne.s32.totalorder %s40, %s41
      %p53 = scmp.eq.s32.totalorder %s15, 1
      %p54 = por %p52, %p53
      %p56 = scmp.ne.s32.totalorder %s41, %s55
      %p57 = scmp.eq.s32.totalorder %s15, 0
      %p58 = por %p56, %p57
      %p59 = scmp.le.s32.totalorder 1, %s9
      %p60 = scmp.lt.s32.totalorder %s9, 3
      %p61 = pnand %p59, %p60
      %p62 = pneg %p61
      // Predicated region
      $region9: #{tpu_custom_call.1} parent=5 // pred_check
        _
      $region10: #{tpu_custom_call.1} parent=5 // pred_check_branch
        %64 = sbr.rel (%p61) target = $region12
      $region11: #{tpu_custom_call.1} parent=5 // pred_region
        %s65 = ssub.s32 %s9, 1
        // Predicated region
        $region13: #{tpu_custom_call.1} parent=11 // pred_check
          %p66 = pneg %p30
        $region14: #{tpu_custom_call.1} parent=11 // pred_check_branch
          %68 = sbr.rel (%p66) target = $region16
        $region15: #{tpu_custom_call.1} parent=11 // pred_region
          %70 = vsyncadd [#allocation3], 0
          %s72 = sshll.u32 %s0, 4
          %s73 = int_to_ptr.hbm [resolvable:$true] %s72
          %s74 = sshll.u32 [#allocation2], 4
          %s75 = int_to_ptr.vmem [resolvable:$true] %s74
          %77 = dma.hbm_to_vmem [thread:$0]  %s73, 128, %s75, [#allocation3]
        $region16: #{tpu_custom_call.1} parent=11 // pred_fallthru
          _
      $region12: #{tpu_custom_call.1} parent=5 // pred_fallthru
        _
      %p78 = scmp.lt.s32.totalorder %s9, 2
      // Predicated region
      $region17: #{tpu_custom_call.1} parent=5 // pred_check
        %p79 = pneg %p78
      $region18: #{tpu_custom_call.1} parent=5 // pred_check_branch
        %81 = sbr.rel (%p79) target = $region20
      $region19: #{tpu_custom_call.1} parent=5 // pred_region
        _
      $region20: #{tpu_custom_call.1} parent=5 // pred_fallthru
        _
      %p82 = scmp.le.s32.totalorder 1, %s9
      %p83 = scmp.lt.s32.totalorder %s9, 3
      %p84 = pnand %p82, %p83
      %p85 = pneg %p84
      // Predicated region
      $region21: #{tpu_custom_call.1} parent=5 // pred_check
        _
      $region22: #{tpu_custom_call.1} parent=5 // pred_check_branch
        %87 = sbr.rel (%p84) target = $region24
      $region23: #{tpu_custom_call.1} parent=5 // pred_region
        %s88 = ssub.s32 %s9, 1
        // Predicated region
        $region25: #{tpu_custom_call.1} parent=23 // pred_check
          %p89 = pneg %p30
        $region26: #{tpu_custom_call.1} parent=23 // pred_check_branch
          %91 = sbr.rel (%p89) target = $region28
        $region27: #{tpu_custom_call.1} parent=23 // pred_region
          %93 = dma.done [#allocation3], 128
        $region28: #{tpu_custom_call.1} parent=23 // pred_fallthru
          _
        %p94 = pneg %p30
        %p95 = pneg %p27
        %p96 = pneg %p51
        %p97 = pneg %p48
        %v98 = vld [vmem:[#allocation2] sm:$0xff]
        %v99 = vadd.f32 %v98, 1.0
        %100 = vst [vmem:[#allocation5] sm:$0xff] %v99
        // Predicated region
        $region29: #{tpu_custom_call.1} parent=23 // pred_check
          %p101 = pneg %p48
        $region30: #{tpu_custom_call.1} parent=23 // pred_check_branch
          %103 = sbr.rel (%p101) target = $region32
        $region31: #{tpu_custom_call.1} parent=23 // pred_region
          %105 = vsyncadd [#allocation4], 0
          %s107 = sshll.u32 [#allocation5], 4
          %s108 = int_to_ptr.vmem [resolvable:$true] %s107
          %s109 = sshll.u32 %s1, 4
          %s110 = int_to_ptr.hbm [resolvable:$true] %s109
          %112 = dma.vmem_to_hbm [thread:$0]  %s108, 128, %s110, [#allocation4]
        $region32: #{tpu_custom_call.1} parent=23 // pred_fallthru
          _
        // Predicated region
        $region33: #{tpu_custom_call.1} parent=23 // pred_check
          %p113 = pneg %p48
        $region34: #{tpu_custom_call.1} parent=23 // pred_check_branch
          %115 = sbr.rel (%p113) target = $region36
        $region35: #{tpu_custom_call.1} parent=23 // pred_region
          %117 = dma.done [#allocation4], 128
        $region36: #{tpu_custom_call.1} parent=23 // pred_fallthru
          _
      $region24: #{tpu_custom_call.1} parent=5 // pred_fallthru
        _
      %p118 = scmp.le.s32.totalorder 2, %s9
      // Predicated region
      $region37: #{tpu_custom_call.1} parent=5 // pred_check
        %p119 = pneg %p118
      $region38: #{tpu_custom_call.1} parent=5 // pred_check_branch
        %121 = sbr.rel (%p119) target = $region40
      $region39: #{tpu_custom_call.1} parent=5 // pred_region
        %s122 = ssub.s32 %s9, 2
      $region40: #{tpu_custom_call.1} parent=5 // pred_fallthru
        _
    $region6: #{tpu_custom_call.1} parent=1 // loop_footer
      %s13 = sadd.s32 1, %s9
    $region7: #{tpu_custom_call.1} parent=1 // loop_footer_branch
      %8 = sbr.rel target = $region3
    $region8: #{tpu_custom_call.1} parent=1 // loop_exit
      _
    %123 = vsyncpa [#allocation3], 1
    %s124 = scalar_lea.sflag [#allocation3], 1
    %125 = vsyncpa %s124, 1
    %126 = vsyncpa [#allocation4], 1
    %s127 = scalar_lea.sflag [#allocation4], 1
    %128 = vsyncpa %s127, 1

// kernel: tpu_custom_call.1
$region0: #{tpu_custom_call.1}
  #allocation0 [shape = 'u32[]', space=smem, size = 0x4, offset = 0x4, fixed_abs, tag = 'smem constant byte address 0x4 - core index']
  #allocation1 [shape = 'u32[72,128]{1,0:T(1,128)}', space=vmem, size = 0x9000, scoped, tag = 'internal scratch']
  %s0 = inlined_call_operand.hbm [shape: f32[64,128], index: 0, kind: input, shape index: {}]
  %s1 = inlined_call_operand.hbm [shape: f32[128,256], index: 1, kind: input, shape index: {}]
  %s2 = inlined_call_operand.hbm [shape: bf16[64,128], index: 2, kind: output, shape index: {0}]
  %s3 = inlined_call_operand.hbm [shape: f32[64,128], index: 3, kind: output, shape index: {1}]
  %4 = xla_tuple %s2, %s3
  %s5 = sld [smem:[#allocation0]]
  $region57: #{tpu_custom_call.1} parent=0
    _
  %s7 = ssub.s32 1, %s5
  %s8 = scalar_select 0, %s7, %s5
  $region1: #{tpu_custom_call.1} parent=0
    #allocation2 [shape = 'u8[32768]{0}', space=vmem, size = 0x8000, scoped, tag = 'input window, operand 0']
    #allocation3 [shape = 's32[2]{0}', space=sflag, size = 0x8, scoped, tag = 'scoped memory for tpu_custom_call.1']
    #allocation4 [shape = 's32[2]{0}', space=sflag, size = 0x8, scoped, tag = 'scoped memory for tpu_custom_call.1']
    #allocation5 [shape = 'u8[131072]{0}', space=vmem, size = 0x20000, scoped, tag = 'input window, operand 1, single buffered']
    #allocation6 [shape = 's32[1]{0}', space=sflag, size = 0x4, scoped, tag = 'scoped memory for tpu_custom_call.1']
    #allocation7 [shape = 'u8[16384]{0}', space=vmem, size = 0x4000, scoped, tag = 'output window, operand 0']
    #allocation8 [shape = 'u8[32768]{0}', space=vmem, size = 0x8000, scoped, tag = 'output window, operand 1']
    #allocation9 [shape = 's32[2]{0}', space=sflag, size = 0x8, scoped, tag = 'scoped memory for tpu_custom_call.1']
    %9 = vsyncpa [#allocation3], 0
    %s10 = scalar_lea.sflag [#allocation3], 1
    %11 = vsyncpa %s10, 0
    %12 = vsyncpa [#allocation6], 0
    %13 = vsyncpa [#allocation4], 0
    %s14 = scalar_lea.sflag [#allocation4], 1
    %15 = vsyncpa %s14, 0
    %16 = vsyncpa [#allocation9], 0
    %s17 = scalar_lea.sflag [#allocation9], 1
    %18 = vsyncpa %s17, 0
    loop: start=0, step=1, limit=4
    $region2: #{tpu_custom_call.1} parent=1 // loop_pre_header
      _
    $region3: #{tpu_custom_call.1} parent=1 // loop_header
      %s20 = sphi 0, %s24
      %p21 = scmp.ge.s32.totalorder %s20, 4
      %s30 = sphi 0, %s32
      %s33 = sphi 0, %s30
      %s34 = sphi 0, %s33
      %s50 = sphi 0, %s34
      %s54 = sphi 0, %s54
      %s56 = sphi 0, %s54
      %s57 = sphi 0, %s56
      %s71 = sphi 0, %s57
      %s77 = sphi 0, %s79
      %s80 = sphi 0, %s77
      %s81 = sphi 0, %s80
      %s97 = sphi 0, %s81
      %s103 = sphi 0, %s105
      %s106 = sphi 0, %s103
      %s107 = sphi 0, %s106
      %s123 = sphi 0, %s107
    $region4: #{tpu_custom_call.1} parent=1 // loop_header_branch
      %23 = sbr.rel (%p21) target = $region8
    $region5: #{tpu_custom_call.1} parent=1 // loop_body
      %s25 = ssub.s32 %s20, 1
      %s26 = ssub.s32 %s20, 2
      %s27 = sadd.s32 %s20, 1
      %s28 = ssub.s32 %s20, %s27
      %p29 = scmp.eq.s32.totalorder %s28, 0
      %s31 = sadd.s32 %s30, 1
      %s32 = scalar_select %p29, %s30, %s31
      %p35 = pneg %p29
      %p36 = scmp.eq.s32.totalorder %s20, 1
      %p37 = por %p35, %p36
      %p38 = scmp.ne.s32.totalorder %s30, %s33
      %p39 = scmp.eq.s32.totalorder %s20, 0
      %p40 = por %p38, %p39
      %p41 = scmp.ne.s32.totalorder %s30, %s33
      %p42 = scmp.eq.s32.totalorder %s25, 1
      %p43 = por %p41, %p42
      %p44 = scmp.ne.s32.totalorder %s33, %s34
      %p45 = scmp.eq.s32.totalorder %s25, 0
      %p46 = por %p44, %p45
      %p47 = scmp.ne.s32.totalorder %s33, %s34
      %p48 = scmp.eq.s32.totalorder %s26, 1
      %p49 = por %p47, %p48
      %p51 = scmp.ne.s32.totalorder %s34, %s50
      %p52 = scmp.eq.s32.totalorder %s26, 0
      %p53 = por %p51, %p52
      %s55 = sadd.s32 %s54, 1
      %p58 = scmp.eq.s32.totalorder %s20, 1
      %p59 = scmp.ne.s32.totalorder %s54, %s56
      %p60 = scmp.eq.s32.totalorder %s20, 0
      %p61 = por %p59, %p60
      %p62 = scmp.ne.s32.totalorder %s54, %s56
      %p63 = scmp.eq.s32.totalorder %s25, 1
      %p64 = por %p62, %p63
      %p65 = scmp.ne.s32.totalorder %s56, %s57
      %p66 = scmp.eq.s32.totalorder %s25, 0
      %p67 = por %p65, %p66
      %p68 = scmp.ne.s32.totalorder %s56, %s57
      %p69 = scmp.eq.s32.totalorder %s26, 1
      %p70 = por %p68, %p69
      %p72 = scmp.ne.s32.totalorder %s57, %s71
      %p73 = scmp.eq.s32.totalorder %s26, 0
      %p74 = por %p72, %p73
      %s75 = ssub.s32 %s20, %s27
      %p76 = scmp.eq.s32.totalorder %s75, 0
      %s78 = sadd.s32 %s77, 1
      %s79 = scalar_select %p76, %s77, %s78
      %p82 = pneg %p76
      %p83 = scmp.eq.s32.totalorder %s20, 1
      %p84 = por %p82, %p83
      %p85 = scmp.ne.s32.totalorder %s77, %s80
      %p86 = scmp.eq.s32.totalorder %s20, 0
      %p87 = por %p85, %p86
      %p88 = scmp.ne.s32.totalorder %s77, %s80
      %p89 = scmp.eq.s32.totalorder %s25, 1
      %p90 = por %p88, %p89
      %p91 = scmp.ne.s32.totalorder %s80, %s81
      %p92 = scmp.eq.s32.totalorder %s25, 0
      %p93 = por %p91, %p92
      %p94 = scmp.ne.s32.totalorder %s80, %s81
      %p95 = scmp.eq.s32.totalorder %s26, 1
      %p96 = por %p94, %p95
      %p98 = scmp.ne.s32.totalorder %s81, %s97
      %p99 = scmp.eq.s32.totalorder %s26, 0
      %p100 = por %p98, %p99
      %s101 = ssub.s32 %s20, %s27
      %p102 = scmp.eq.s32.totalorder %s101, 0
      %s104 = sadd.s32 %s103, 1
      %s105 = scalar_select %p102, %s103, %s104
      %p108 = pneg %p102
      %p109 = scmp.eq.s32.totalorder %s20, 1
      %p110 = por %p108, %p109
      %p111 = scmp.ne.s32.totalorder %s103, %s106
      %p112 = scmp.eq.s32.totalorder %s20, 0
      %p113 = por %p111, %p112
      %p114 = scmp.ne.s32.totalorder %s103, %s106
      %p115 = scmp.eq.s32.totalorder %s25, 1
      %p116 = por %p114, %p115
      %p117 = scmp.ne.s32.totalorder %s106, %s107
      %p118 = scmp.eq.s32.totalorder %s25, 0
      %p119 = por %p117, %p118
      %p120 = scmp.ne.s32.totalorder %s106, %s107
      %p121 = scmp.eq.s32.totalorder %s26, 1
      %p122 = por %p120, %p121
      %p124 = scmp.ne.s32.totalorder %s107, %s123
      %p125 = scmp.eq.s32.totalorder %s26, 0
      %p126 = por %p124, %p125
      %p127 = scmp.le.s32.totalorder 1, %s20
      %p128 = scmp.lt.s32.totalorder %s20, 3
      %p129 = pnand %p127, %p128
      %p130 = pneg %p129
      // Predicated region
      $region9: #{tpu_custom_call.1} parent=5 // pred_check
        _
      $region10: #{tpu_custom_call.1} parent=5 // pred_check_branch
        %132 = sbr.rel (%p129) target = $region12
      $region11: #{tpu_custom_call.1} parent=5 // pred_region
        %s133 = ssub.s32 %s20, 1
        // Predicated region
        $region13: #{tpu_custom_call.1} parent=11 // pred_check
          %p134 = pneg %p67
        $region14: #{tpu_custom_call.1} parent=11 // pred_check_branch
          %136 = sbr.rel (%p134) target = $region16
        $region15: #{tpu_custom_call.1} parent=11 // pred_region
          %138 = vsyncadd [#allocation6], 0
          %s139 = sshll.u32 %s1, 4
          %s140 = int_to_ptr.hbm [resolvable:$true] %s139
          %s141 = sshll.u32 [#allocation5], 4
          %s142 = int_to_ptr.vmem [resolvable:$true] %s141
          %147 = dma.hbm_to_vmem [thread:$0]  %s140, 4096, %s142, [#allocation6], 256, 256, 16
        $region16: #{tpu_custom_call.1} parent=11 // pred_fallthru
          _
      $region12: #{tpu_custom_call.1} parent=5 // pred_fallthru
        _
      %p148 = scmp.lt.s32.totalorder %s20, 2
      // Predicated region
      $region17: #{tpu_custom_call.1} parent=5 // pred_check
        %p149 = pneg %p148
      $region18: #{tpu_custom_call.1} parent=5 // pred_check_branch
        %151 = sbr.rel (%p149) target = $region20
      $region19: #{tpu_custom_call.1} parent=5 // pred_region
        // Predicated region
        $region21: #{tpu_custom_call.1} parent=19 // pred_check
          %p152 = pneg %p40
        $region22: #{tpu_custom_call.1} parent=19 // pred_check_branch
          %154 = sbr.rel (%p152) target = $region24
        $region23: #{tpu_custom_call.1} parent=19 // pred_region
          %s155 = sand.u32 %s30, 1
          %s156 = scalar_lea.sflag [#allocation3], %s155
          %s157 = sand.u32 %s30, 1
          %s158 = smul.addr %s157, 32
          %s159 = scalar_lea.vmem [#allocation2], %s158
          %s160 = smul.u32 4, %s20
          %162 = vsyncadd %s156, 0
          %s163 = smul.addr %s160, 8
          %s164 = scalar_lea.hbm %s0, %s163
          %s165 = sshll.u32 %s164, 4
          %s166 = int_to_ptr.hbm [resolvable:$true] %s165
          %s167 = sshll.u32 %s159, 4
          %s168 = int_to_ptr.vmem [resolvable:$true] %s167
          %173 = dma.hbm_to_vmem [thread:$0]  %s166, 512, %s168, %s156, 128, 128, 8
        $region24: #{tpu_custom_call.1} parent=19 // pred_fallthru
          _
      $region20: #{tpu_custom_call.1} parent=5 // pred_fallthru
        _
      %p174 = scmp.le.s32.totalorder 1, %s20
      %p175 = scmp.lt.s32.totalorder %s20, 3
      %p176 = pnand %p174, %p175
      %p177 = pneg %p176
      // Predicated region
      $region25: #{tpu_custom_call.1} parent=5 // pred_check
        _
      $region26: #{tpu_custom_call.1} parent=5 // pred_check_branch
        %179 = sbr.rel (%p176) target = $region28
      $region27: #{tpu_custom_call.1} parent=5 // pred_region
        %s180 = ssub.s32 %s20, 1
        %s181 = sand.u32 %s33, 1
        %s182 = scalar_lea.sflag [#allocation3], %s181
        %s183 = sand.u32 %s33, 1
        %s184 = smul.addr %s183, 32
        %s185 = scalar_lea.vmem [#allocation2], %s184
        // Predicated region
        $region29: #{tpu_custom_call.1} parent=27 // pred_check
          %p186 = pneg %p46
        $region30: #{tpu_custom_call.1} parent=27 // pred_check_branch
          %188 = sbr.rel (%p186) target = $region32
        $region31: #{tpu_custom_call.1} parent=27 // pred_region
          %190 = dma.done %s182, 512
        $region32: #{tpu_custom_call.1} parent=27 // pred_fallthru
          _
        // Predicated region
        $region33: #{tpu_custom_call.1} parent=27 // pred_check
          %p191 = pneg %p67
        $region34: #{tpu_custom_call.1} parent=27 // pred_check_branch
          %193 = sbr.rel (%p191) target = $region36
        $region35: #{tpu_custom_call.1} parent=27 // pred_region
          %195 = dma.done [#allocation6], 4096
        $region36: #{tpu_custom_call.1} parent=27 // pred_fallthru
          _
        %s196 = sand.u32 %s33, 1
        %s197 = scalar_lea.sflag [#allocation3], %s196
        %s198 = sand.u32 %s33, 1
        %s199 = smul.addr %s198, 32
        %s200 = scalar_lea.vmem [#allocation2], %s199
        %p201 = pneg %p46
        %p202 = pneg %p43
        %p203 = pneg %p67
        %p204 = pneg %p64
        %p205 = pneg %p93
        %p206 = pneg %p90
        %s207 = sand.u32 %s80, 1
        %s208 = scalar_lea.sflag [#allocation4], %s207
        %s209 = sand.u32 %s80, 1
        %s210 = smul.addr %s209, 16
        %s211 = scalar_lea.vmem [#allocation7], %s210
        %p212 = pneg %p119
        %p213 = pneg %p116
        %s214 = sand.u32 %s106, 1
        %s215 = scalar_lea.sflag [#allocation9], %s214
        %s216 = sand.u32 %s106, 1
        %s217 = smul.addr %s216, 32
        %s218 = scalar_lea.vmem [#allocation8], %s217
        %s219 = smul.u32 4, %s25
        %s220 = smul.u32 4, %s25
        %s221 = smul.u32 4, %s25
        %v222 = vld [vmem:[%s185] sm:$0xff]
        %v223 = vld [vmem:[%s185 + $0x8] sm:$0xff]
        %v224 = vld [vmem:[%s185 + $0x10] sm:$0xff]
        %v225 = vld [vmem:[%s185 + $0x18] sm:$0xff]
        %v226 = vld [vmem:[#allocation5] sm:$0xff]
        %v227 = vld [vmem:[#allocation5 + $0x8] sm:$0xff]
        %v228 = vld [vmem:[#allocation5 + $0x10] sm:$0xff]
        %v229 = vld [vmem:[#allocation5 + $0x18] sm:$0xff]
        %v230 = vld [vmem:[#allocation5 + $0x20] sm:$0xff]
        %v231 = vld [vmem:[#allocation5 + $0x28] sm:$0xff]
        %v232 = vld [vmem:[#allocation5 + $0x30] sm:$0xff]
        %v233 = vld [vmem:[#allocation5 + $0x38] sm:$0xff]
        %v234 = vld [vmem:[#allocation5 + $0x40] sm:$0xff]
        %v235 = vld [vmem:[#allocation5 + $0x48] sm:$0xff]
        %v236 = vld [vmem:[#allocation5 + $0x50] sm:$0xff]
        %v237 = vld [vmem:[#allocation5 + $0x58] sm:$0xff]
        %v238 = vld [vmem:[#allocation5 + $0x60] sm:$0xff]
        %v239 = vld [vmem:[#allocation5 + $0x68] sm:$0xff]
        %v240 = vld [vmem:[#allocation5 + $0x70] sm:$0xff]
        %v241 = vld [vmem:[#allocation5 + $0x78] sm:$0xff]
        %v242 = vld [vmem:[#allocation5 + $0x80] sm:$0xff]
        %v243 = vld [vmem:[#allocation5 + $0x88] sm:$0xff]
        %v244 = vld [vmem:[#allocation5 + $0x90] sm:$0xff]
        %v245 = vld [vmem:[#allocation5 + $0x98] sm:$0xff]
        %v246 = vld [vmem:[#allocation5 + $0xa0] sm:$0xff]
        %v247 = vld [vmem:[#allocation5 + $0xa8] sm:$0xff]
        %v248 = vld [vmem:[#allocation5 + $0xb0] sm:$0xff]
        %v249 = vld [vmem:[#allocation5 + $0xb8] sm:$0xff]
        %v250 = vld [vmem:[#allocation5 + $0xc0] sm:$0xff]
        %v251 = vld [vmem:[#allocation5 + $0xc8] sm:$0xff]
        %v252 = vld [vmem:[#allocation5 + $0xd0] sm:$0xff]
        %v253 = vld [vmem:[#allocation5 + $0xd8] sm:$0xff]
        %v254 = vld [vmem:[#allocation5 + $0xe0] sm:$0xff]
        %v255 = vld [vmem:[#allocation5 + $0xe8] sm:$0xff]
        %v256 = vld [vmem:[#allocation5 + $0xf0] sm:$0xff]
        %v257 = vld [vmem:[#allocation5 + $0xf8] sm:$0xff]
        %258 = vmatpush.msra.mxu0 %v256
        %259 = vmatpush.msra.mxu0 %v254
        %260 = vmatpush.msra.mxu0 %v252
        %261 = vmatpush.msra.mxu0 %v250
        %262 = vmatpush.msra.mxu0 %v248
        %263 = vmatpush.msra.mxu0 %v246
        %264 = vmatpush.msra.mxu0 %v244
        %265 = vmatpush.msra.mxu0 %v242
        %266 = vmatpush.msra.mxu0 %v240
        %267 = vmatpush.msra.mxu0 %v238
        %268 = vmatpush.msra.mxu0 %v236
        %269 = vmatpush.msra.mxu0 %v234
        %270 = vmatpush.msra.mxu0 %v232
        %271 = vmatpush.msra.mxu0 %v230
        %272 = vmatpush.msra.mxu0 %v228
        %273 = vmatpush.msra.mxu0 %v226
        %274 = vmatmul.f32.gmra.mxu0 %v222
        %v275 = vpop.f32.mrf.mxu0
        %v276 = vadd.f32 0.0, %v275
        %277 = vmatmul.f32.gmra.mxu0 %v223
        %v278 = vpop.f32.mrf.mxu0
        %v279 = vadd.f32 0.0, %v278
        %280 = vmatmul.f32.gmra.mxu0 %v224
        %v281 = vpop.f32.mrf.mxu0
        %v282 = vadd.f32 0.0, %v281
        %283 = vmatmul.f32.gmra.mxu0 %v225
        %v284 = vpop.f32.mrf.mxu0
        %v285 = vadd.f32 0.0, %v284
        %286 = vdwg.mxu0
        %287 = vmatpush.msra.mxu0 %v257
        %288 = vmatpush.msra.mxu0 %v255
        %289 = vmatpush.msra.mxu0 %v253
        %290 = vmatpush.msra.mxu0 %v251
        %291 = vmatpush.msra.mxu0 %v249
        %292 = vmatpush.msra.mxu0 %v247
        %293 = vmatpush.msra.mxu0 %v245
        %294 = vmatpush.msra.mxu0 %v243
        %295 = vmatpush.msra.mxu0 %v241
        %296 = vmatpush.msra.mxu0 %v239
        %297 = vmatpush.msra.mxu0 %v237
        %298 = vmatpush.msra.mxu0 %v235
        %299 = vmatpush.msra.mxu0 %v233
        %300 = vmatpush.msra.mxu0 %v231
        %301 = vmatpush.msra.mxu0 %v229
        %302 = vmatpush.msra.mxu0 %v227
        %303 = vmatmul.f32.gmra.mxu0 %v222
        %v304 = vpop.f32.mrf.mxu0
        %v305 = vadd.f32 0.0, %v304
        %306 = vmatmul.f32.gmra.mxu0 %v223
        %v307 = vpop.f32.mrf.mxu0
        %v308 = vadd.f32 0.0, %v307
        %309 = vmatmul.f32.gmra.mxu0 %v224
        %v310 = vpop.f32.mrf.mxu0
        %v311 = vadd.f32 0.0, %v310
        %312 = vmatmul.f32.gmra.mxu0 %v225
        %v313 = vpop.f32.mrf.mxu0
        %v314 = vadd.f32 0.0, %v313
        %315 = vdwg.mxu0
        %v316 = vpack.c.bf16 %v276, %v276
        %v317 = vpack.c.bf16 %v279, %v279
        %v318 = vpack.c.bf16 %v282, %v282
        %v319 = vpack.c.bf16 %v285, %v285
        %320 = vst [vmem:[%s211] sm:$0xf] %v316
        %321 = vst [vmem:[%s211 + $0x4] sm:$0xf] %v317
        %322 = vst [vmem:[%s211 + $0x8] sm:$0xf] %v318
        %323 = vst [vmem:[%s211 + $0xc] sm:$0xf] %v319
        %324 = vst [vmem:[%s218] sm:$0xff] %v305
        %325 = vst [vmem:[%s218 + $0x8] sm:$0xff] %v308
        %326 = vst [vmem:[%s218 + $0x10] sm:$0xff] %v311
        %327 = vst [vmem:[%s218 + $0x18] sm:$0xff] %v314
        %s328 = sand.u32 %s80, 1
        %s329 = scalar_lea.sflag [#allocation4], %s328
        %s330 = sand.u32 %s80, 1
        %s331 = smul.addr %s330, 16
        %s332 = scalar_lea.vmem [#allocation7], %s331
        %s333 = sand.u32 %s106, 1
        %s334 = scalar_lea.sflag [#allocation9], %s333
        %s335 = sand.u32 %s106, 1
        %s336 = smul.addr %s335, 32
        %s337 = scalar_lea.vmem [#allocation8], %s336
        // Predicated region
        $region37: #{tpu_custom_call.1} parent=27 // pred_check
          %p338 = pneg %p90
        $region38: #{tpu_custom_call.1} parent=27 // pred_check_branch
          %340 = sbr.rel (%p338) target = $region40
        $region39: #{tpu_custom_call.1} parent=27 // pred_region
          %s341 = smul.u32 4, %s25
          %343 = vsyncadd %s329, 0
          %s344 = smul.addr %s341, 4
          %s345 = scalar_lea.hbm %s2, %s344
          %s346 = sshll.u32 %s332, 4
          %s347 = int_to_ptr.vmem [resolvable:$true] %s346
          %s348 = sshll.u32 %s345, 4
          %s349 = int_to_ptr.hbm [resolvable:$true] %s348
          %354 = dma.vmem_to_hbm [thread:$0]  %s347, 256, %s349, %s329, 64, 64, 4
        $region40: #{tpu_custom_call.1} parent=27 // pred_fallthru
          _
        // Predicated region
        $region41: #{tpu_custom_call.1} parent=27 // pred_check
          %p355 = pneg %p116
        $region42: #{tpu_custom_call.1} parent=27 // pred_check_branch
          %357 = sbr.rel (%p355) target = $region44
        $region43: #{tpu_custom_call.1} parent=27 // pred_region
          %s358 = smul.u32 4, %s25
          %360 = vsyncadd %s334, 0
          %s361 = smul.addr %s358, 8
          %s362 = scalar_lea.hbm %s3, %s361
          %s363 = sshll.u32 %s337, 4
          %s364 = int_to_ptr.vmem [resolvable:$true] %s363
          %s365 = sshll.u32 %s362, 4
          %s366 = int_to_ptr.hbm [resolvable:$true] %s365
          %371 = dma.vmem_to_hbm [thread:$0]  %s364, 512, %s366, %s334, 128, 128, 8
        $region44: #{tpu_custom_call.1} parent=27 // pred_fallthru
          _
      $region28: #{tpu_custom_call.1} parent=5 // pred_fallthru
        _
      %p372 = scmp.le.s32.totalorder 2, %s20
      // Predicated region
      $region45: #{tpu_custom_call.1} parent=5 // pred_check
        %p373 = pneg %p372
      $region46: #{tpu_custom_call.1} parent=5 // pred_check_branch
        %375 = sbr.rel (%p373) target = $region48
      $region47: #{tpu_custom_call.1} parent=5 // pred_region
        %s376 = ssub.s32 %s20, 2
        // Predicated region
        $region49: #{tpu_custom_call.1} parent=47 // pred_check
          %p377 = pneg %p96
        $region50: #{tpu_custom_call.1} parent=47 // pred_check_branch
          %379 = sbr.rel (%p377) target = $region52
        $region51: #{tpu_custom_call.1} parent=47 // pred_region
          %s380 = sand.u32 %s81, 1
          %s381 = scalar_lea.sflag [#allocation4], %s380
          %s382 = sand.u32 %s81, 1
          %s383 = smul.addr %s382, 16
          %s384 = scalar_lea.vmem [#allocation7], %s383
          %386 = dma.done %s381, 256
        $region52: #{tpu_custom_call.1} parent=47 // pred_fallthru
          _
        // Predicated region
        $region53: #{tpu_custom_call.1} parent=47 // pred_check
          %p387 = pneg %p122
        $region54: #{tpu_custom_call.1} parent=47 // pred_check_branch
          %389 = sbr.rel (%p387) target = $region56
        $region55: #{tpu_custom_call.1} parent=47 // pred_region
          %s390 = sand.u32 %s107, 1
          %s391 = scalar_lea.sflag [#allocation9], %s390
          %s392 = sand.u32 %s107, 1
          %s393 = smul.addr %s392, 32
          %s394 = scalar_lea.vmem [#allocation8], %s393
          %396 = dma.done %s391, 512
        $region56: #{tpu_custom_call.1} parent=47 // pred_fallthru
          _
      $region48: #{tpu_custom_call.1} parent=5 // pred_fallthru
        _
    $region6: #{tpu_custom_call.1} parent=1 // loop_footer
      %s24 = sadd.s32 1, %s20
    $region7: #{tpu_custom_call.1} parent=1 // loop_footer_branch
      %19 = sbr.rel target = $region3
    $region8: #{tpu_custom_call.1} parent=1 // loop_exit
      _
    %397 = vsyncpa [#allocation3], 1
    %s398 = scalar_lea.sflag [#allocation3], 1
    %399 = vsyncpa %s398, 1
    %400 = vsyncpa [#allocation6], 1
    %401 = vsyncpa [#allocation4], 1
    %s402 = scalar_lea.sflag [#allocation4], 1
    %403 = vsyncpa %s402, 1
    %404 = vsyncpa [#allocation9], 1
    %s405 = scalar_lea.sflag [#allocation9], 1
    %406 = vsyncpa %s405, 1

</llo_original>
